<compile_context>
chip_gen: v5e
topology: v5e:2x2
jax: 0.10.0
libtpu: 0.0.40
codegen_flags: <defaults>
</compile_context>

<pallas_src>
import jax
import jax.numpy as jnp
from jax.experimental import pallas as pl
from jax.experimental.pallas import tpu as pltpu


def _copy_kernel(x_ref, o_ref):
    # Pure pass-through: whole-tile vreg copy (co-issues vld/vst optimally).
    o_ref[...] = x_ref[...]


def _round_up(a: int, b: int) -> int:
    return ((a + b - 1) // b) * b


_LANES = 1024      # lane-dense slab width (multiple of 128)
_MAX_TR = 1024     # up to 1024 rows -> 4 MiB f32 tile; 16 MiB VMEM with
                   # in+out x double-buffer, within scoped limits on all gens


def _identity_pallas(x: jax.Array) -> jax.Array:
    """Materialized identity copy of a single array via a Pallas kernel."""
    if not isinstance(x, jax.Array):
        x = jnp.asarray(x)
    if x.size == 0:
        return x

    orig_shape = x.shape
    dtype = x.dtype
    itemsize = jnp.dtype(dtype).itemsize

    # Flatten to a lane-dense 2-D slab (R, _LANES).  Padding (if any) keeps
    # every block (8,128)-aligned so we never fall back to a full-extent
    # block (VMEM hazard on v7x for large ragged shapes).
    flat = x.reshape(-1)
    n = flat.size
    rows = pl.cdiv(n, _LANES)
    tr = min(_MAX_TR, _round_up(rows, 8))     # row-tile: multiple of 8
    r_pad = _round_up(rows, tr)               # rows: multiple of the tile
    n_pad = r_pad * _LANES
    if n_pad != n:
        flat = jnp.pad(flat, (0, n_pad - n))
    slab = flat.reshape(r_pad, _LANES)

    grid = (r_pad // tr,)

    out = pl.pallas_call(
        _copy_kernel,
        out_shape=jax.ShapeDtypeStruct((r_pad, _LANES), dtype),
        grid_spec=pltpu.PrefetchScalarGridSpec(
            num_scalar_prefetch=0,
            grid=grid,
            in_specs=[pl.BlockSpec((tr, _LANES), lambda i: (i, 0))],
            out_specs=pl.BlockSpec((tr, _LANES), lambda i: (i, 0)),
        ),
        compiler_params=pltpu.CompilerParams(
            dimension_semantics=("parallel",),
            vmem_limit_bytes=32 * 1024 * 1024,
        ),
        cost_estimate=pl.CostEstimate(
            flops=0,
            transcendentals=0,
            bytes_accessed=2 * n_pad * itemsize,
        ),
    )(slab)

    out_flat = out.reshape(-1)
    if n_pad != n:
        out_flat = out_flat[:n]
    return out_flat.reshape(orig_shape)


class Trivial:
    """JAX/Pallas port of pypose Trivial: get anything, return anything.

    By default this is a true pass-through (no kernel launch, no copy) --
    the fastest correct implementation of identity semantics.  Construct
    with copy=True to route array inputs through the Pallas identity-copy
    kernel (materializes a fresh buffer).
    """

    def __init__(self, *args, copy: bool = False, **kwargs):
        # Module has no parameters.
        self._copy = copy

    def __call__(self, *args, **kwargs):
        return self.forward(*args, **kwargs)

    def forward(self, *args, **kwargs):
        out = (*args, *kwargs.values())
        if self._copy:
            out = tuple(
                _identity_pallas(o) if isinstance(o, jax.Array) else o
                for o in out
            )
        return out[0] if len(out) == 1 else out


if __name__ == "__main__":
    key = jax.random.PRNGKey(0)
    k1, k2 = jax.random.split(key)

    # Small shapes consistent with a generic nn.Module input.
    x = jax.random.normal(k1, (2, 4, 16, 16), dtype=jnp.float32)
    y = jax.random.normal(k2, (2, 32), dtype=jnp.float32)

    # --- Default fast path: pure pass-through, no kernel (recommended). ---
    triv = Trivial()
    out_single = triv(x)
    assert out_single.shape == x.shape and out_single.dtype == x.dtype
    assert bool(jnp.array_equal(out_single, x))

    out_multi = triv(x, y, extra=y)
    assert isinstance(out_multi, tuple) and len(out_multi) == 3
    assert bool(jnp.array_equal(out_multi[0], x))
    assert bool(jnp.array_equal(out_multi[1], y))
    assert bool(jnp.array_equal(out_multi[2], y))

    # --- Explicit materialized-copy path: runs the Pallas kernel. ---
    triv_copy = Trivial(copy=True)
    out_copy = triv_copy(x)
    out_copy = jax.block_until_ready(out_copy)
    assert out_copy.shape == x.shape and out_copy.dtype == x.dtype
    assert bool(jnp.array_equal(out_copy, x))

    out_copy_multi = triv_copy(x, y, extra=y)
    out_copy_multi = jax.block_until_ready(out_copy_multi)
    assert isinstance(out_copy_multi, tuple) and len(out_copy_multi) == 3
    assert bool(jnp.array_equal(out_copy_multi[0], x))
    assert bool(jnp.array_equal(out_copy_multi[1], y))
    assert bool(jnp.array_equal(out_copy_multi[2], y))

    print("KERNEL_OK")
</pallas_src>

<mosaic_0001>
module attributes {stable_mosaic.version = 11 : i64} {
  func.func @_copy_kernel(%arg0: i32, %arg1: memref<8x1024xf32, #tpu.memory_space<vmem>>, %arg2: memref<8x1024xf32, #tpu.memory_space<vmem>>) attributes {dimension_semantics = [#tpu.dimension_semantics<parallel>], iteration_bounds = array<i64: 1>, scalar_prefetch = 0 : i64, scratch_operands = 0 : i64, tpu.core_type = #tpu.core_type<tc>, window_params = [{transform_indices = @transform_0, window_bounds = array<i64: 8, 1024>}, {transform_indices = @transform_1, window_bounds = array<i64: 8, 1024>}]} {
    %c0 = arith.constant 0 : index
    %c0_0 = arith.constant 0 : index
    %0 = vector.load %arg1[%c0, %c0_0] : memref<8x1024xf32, #tpu.memory_space<vmem>>, vector<8x1024xf32>
    %c0_1 = arith.constant 0 : index
    %c0_2 = arith.constant 0 : index
    %1 = vector.load %arg2[%c0_1, %c0_2] : memref<8x1024xf32, #tpu.memory_space<vmem>>, vector<8x1024xf32>
    tpu.vector_store %arg2[%c0_1, %c0_2], %0 {strides = array<i32>} : memref<8x1024xf32, #tpu.memory_space<vmem>>, vector<8x1024xf32>,
    return
  }
  func.func @transform_0(%arg0: i32) -> (i32, i32) {
    %c0_i32 = arith.constant 0 : i32
    %c0_i32_0 = arith.constant 0 : i32
    return %arg0, %c0_i32 : i32, i32
  }
  func.func @transform_1(%arg0: i32) -> (i32, i32) {
    %c0_i32 = arith.constant 0 : i32
    %c0_i32_0 = arith.constant 0 : i32
    return %arg0, %c0_i32 : i32, i32
  }
}

</mosaic_0001>

<llo_original>
// kernel: tpu_custom_call.1
$region0: #{tpu_custom_call.1}
  #allocation0 [shape = 'u32[]', space=smem, size = 0x4, offset = 0x4, fixed_abs, tag = 'smem constant byte address 0x4 - core index']
  #allocation1 [shape = 'u32[72,128]{1,0:T(1,128)}', space=vmem, size = 0x9000, scoped, tag = 'internal scratch']
  %s0 = inlined_call_operand.hbm [shape: f32[8,1024], index: 0, kind: input, shape index: {}]
  %s1 = inlined_call_operand.hbm [shape: f32[8,1024], index: 1, kind: output, shape index: {}]
  %s2 = sld [smem:[#allocation0]]
  $region18: #{tpu_custom_call.1} parent=0
    _
  %s4 = ssub.s32 1, %s2
  %s5 = scalar_select 0, %s4, %s2
  $region1: #{tpu_custom_call.1} parent=0
    #allocation2 [shape = 'u8[32768]{0}', space=vmem, size = 0x8000, scoped, tag = 'input window, operand 0, single buffered']
    #allocation3 [shape = 's32[1]{0}', space=sflag, size = 0x4, scoped, tag = 'scoped memory for tpu_custom_call.1']
    #allocation4 [shape = 's32[1]{0}', space=sflag, size = 0x4, scoped, tag = 'scoped memory for tpu_custom_call.1']
    #allocation5 [shape = 'u8[32768]{0}', space=vmem, size = 0x8000, scoped, tag = 'output window, operand 0, single buffered']
    %6 = vsyncpa [#allocation3], 0
    %7 = vsyncpa [#allocation4], 0
    // Predicated region
    $region2: #{tpu_custom_call.1} parent=1 // pred_check
      _
    $region3: #{tpu_custom_call.1} parent=1 // pred_check_branch
      %9 = sbr.rel (0) target = $region5
    $region4: #{tpu_custom_call.1} parent=1 // pred_region
      %11 = vsyncadd [#allocation3], 0
      %s13 = sshll.u32 %s0, 4
      %s14 = int_to_ptr.hbm [resolvable:$true] %s13
      %s15 = sshll.u32 [#allocation2], 4
      %s16 = int_to_ptr.vmem [resolvable:$true] %s15
      %18 = dma.hbm_to_vmem [thread:$0]  %s14, 1024, %s16, [#allocation3]
    $region5: #{tpu_custom_call.1} parent=1 // pred_fallthru
      _
    // Predicated region
    $region6: #{tpu_custom_call.1} parent=1 // pred_check
      _
    $region7: #{tpu_custom_call.1} parent=1 // pred_check_branch
      %20 = sbr.rel (0) target = $region9
    $region8: #{tpu_custom_call.1} parent=1 // pred_region
      %22 = dma.done [#allocation3], 1024
    $region9: #{tpu_custom_call.1} parent=1 // pred_fallthru
      _
    %v23 = vld [vmem:[#allocation2] sm:$0xff]
    %v24 = vld [vmem:[#allocation2 + $0x8] sm:$0xff]
    %v25 = vld [vmem:[#allocation2 + $0x10] sm:$0xff]
    %v26 = vld [vmem:[#allocation2 + $0x18] sm:$0xff]
    %v27 = vld [vmem:[#allocation2 + $0x20] sm:$0xff]
    %v28 = vld [vmem:[#allocation2 + $0x28] sm:$0xff]
    %v29 = vld [vmem:[#allocation2 + $0x30] sm:$0xff]
    %v30 = vld [vmem:[#allocation2 + $0x38] sm:$0xff]
    %31 = vst [vmem:[#allocation5] sm:$0xff] %v23
    %32 = vst [vmem:[#allocation5 + $0x8] sm:$0xff] %v24
    %33 = vst [vmem:[#allocation5 + $0x10] sm:$0xff] %v25
    %34 = vst [vmem:[#allocation5 + $0x18] sm:$0xff] %v26
    %35 = vst [vmem:[#allocation5 + $0x20] sm:$0xff] %v27
    %36 = vst [vmem:[#allocation5 + $0x28] sm:$0xff] %v28
    %37 = vst [vmem:[#allocation5 + $0x30] sm:$0xff] %v29
    %38 = vst [vmem:[#allocation5 + $0x38] sm:$0xff] %v30
    // Predicated region
    $region10: #{tpu_custom_call.1} parent=1 // pred_check
      _
    $region11: #{tpu_custom_call.1} parent=1 // pred_check_branch
      %40 = sbr.rel (0) target = $region13
    $region12: #{tpu_custom_call.1} parent=1 // pred_region
      %42 = vsyncadd [#allocation4], 0
      %s44 = sshll.u32 [#allocation5], 4
      %s45 = int_to_ptr.vmem [resolvable:$true] %s44
      %s46 = sshll.u32 %s1, 4
      %s47 = int_to_ptr.hbm [resolvable:$true] %s46
      %49 = dma.vmem_to_hbm [thread:$0]  %s45, 1024, %s47, [#allocation4]
    $region13: #{tpu_custom_call.1} parent=1 // pred_fallthru
      _
    // Predicated region
    $region14: #{tpu_custom_call.1} parent=1 // pred_check
      _
    $region15: #{tpu_custom_call.1} parent=1 // pred_check_branch
      %51 = sbr.rel (0) target = $region17
    $region16: #{tpu_custom_call.1} parent=1 // pred_region
      %53 = dma.done [#allocation4], 1024
    $region17: #{tpu_custom_call.1} parent=1 // pred_fallthru
      _
    %54 = vsyncpa [#allocation3], 1
    %55 = vsyncpa [#allocation4], 1

</llo_original>
